<compile_context>
chip_gen: v7x
topology: tpu7x:2x2x1
jax: 0.10.0
libtpu: 0.0.40
codegen_flags: <defaults>
</compile_context>

<pallas_src>
import functools

import jax
import jax.numpy as jnp
from jax.experimental import pallas as pl
from jax.experimental.pallas import tpu as pltpu


def _apply_activation(y, activation):
    if activation == "relu":
        return jnp.maximum(y, 0.0)
    elif activation == "sigmoid":
        return jax.nn.sigmoid(y)
    elif activation == "tanh":
        return jnp.tanh(y)
    elif activation == "none":
        return y
    else:
        raise ValueError(f"Unknown activation {activation}")


def _round_up(n, m):
    return ((n + m - 1) // m) * m


def _cdiv(a, b):
    return -(-a // b)


def _pad2d(a, rows, cols):
    if a.shape == (rows, cols):
        return a
    return jnp.zeros((rows, cols), a.dtype).at[: a.shape[0], : a.shape[1]].set(a)


def _vmem_capacity_bytes():
    try:
        return int(pltpu.get_tpu_info().vmem_capacity_bytes)
    except Exception:
        return 64 << 20  # conservative: v7x per-TensorCore VMEM


# ----------------------------------------------------------------------------
# Kernels
# ----------------------------------------------------------------------------
def _rbm_kernel_resident(x_ref, w1_ref, b1_ref, w2_ref, b2_ref, o_ref, *,
                         activation, compute_dtype):
    # Both weight matrices VMEM-resident; single batch-parallel grid axis.
    x = x_ref[...].astype(compute_dtype)
    h = jnp.dot(x, w1_ref[...], preferred_element_type=jnp.float32) + b1_ref[...]
    h = _apply_activation(h, activation).astype(compute_dtype)
    out = jnp.dot(h, w2_ref[...], preferred_element_type=jnp.float32) + b2_ref[...]
    o_ref[...] = out.astype(o_ref.dtype)


def _rbm_kernel_streamed(x_ref, w1_ref, b1_ref, w2_ref, b2_ref, o_ref, h_ref, *,
                         activation, compute_dtype):
    # Grid = (batch tiles, output-column tiles). W2/b2 stream over axis 1;
    # h is computed once per batch tile and cached in VMEM scratch.
    @pl.when(pl.program_id(1) == 0)
    def _():
        x = x_ref[...].astype(compute_dtype)
        h = jnp.dot(x, w1_ref[...], preferred_element_type=jnp.float32) + b1_ref[...]
        h_ref[...] = _apply_activation(h, activation).astype(compute_dtype)

    out = (jnp.dot(h_ref[...], w2_ref[...], preferred_element_type=jnp.float32)
           + b2_ref[...])
    o_ref[...] = out.astype(o_ref.dtype)


# ----------------------------------------------------------------------------
# Wrapper
# ----------------------------------------------------------------------------
def prepare_params(w1, b1, w2, b2, *, compute_dtype=jnp.bfloat16):
    """Pad feature dims to lane multiples of 128 and cast weights once.

    The returned tuple is cacheable across forward calls, removing the
    per-call pad/cast HBM pass over the weight matrices.
    w1: (num_input, num_hidden) = torch l1.weight.T
    w2: (num_hidden, num_input) = torch l2.weight.T
    """
    num_input, num_hidden = w1.shape
    ni_p = _round_up(num_input, 128)
    nh_p = _round_up(num_hidden, 128)
    # NOTE: padded W2 rows MUST stay zero so padded hidden units (whose
    # activation can be non-zero, e.g. sigmoid(0)=0.5) contribute nothing.
    w1_p = _pad2d(w1, ni_p, nh_p).astype(compute_dtype)
    w2_p = _pad2d(w2, nh_p, ni_p).astype(compute_dtype)
    b1_p = _pad2d(b1.astype(jnp.float32).reshape(1, -1), 1, nh_p)
    b2_p = _pad2d(b2.astype(jnp.float32).reshape(1, -1), 1, ni_p)
    return (num_input, num_hidden, w1_p, b1_p, w2_p, b2_p)


def _vmem_needed(batch_tile, ni_p, nh_p, tn, n_col, csize, osize, wbuf):
    """Rough VMEM budget: pipelined tiles + weights + in-kernel temporaries."""
    x_bytes = 2 * batch_tile * ni_p * 4            # f32 x tile, double-buffered
    out_bytes = 2 * batch_tile * tn * osize        # output tile, double-buffered
    w1_bytes = wbuf * (ni_p * nh_p * csize + nh_p * 4)
    if n_col == 1:
        w2_bytes = wbuf * (nh_p * ni_p * csize + ni_p * 4)
        scratch = 0
    else:
        w2_bytes = 2 * (nh_p * tn * csize + tn * 4)
        scratch = batch_tile * nh_p * csize        # h scratch
    # f32 h + recast to compute_dtype + f32 result of the second dot.
    temps = batch_tile * nh_p * (4 + csize) + batch_tile * tn * 4
    return x_bytes + out_bytes + w1_bytes + w2_bytes + scratch + temps + (4 << 20)


def rbm_forward(x, params, *, activation="relu", compute_dtype=jnp.bfloat16,
                batch_tile=None, n_col_tiles=None, out_dtype=None):
    """Fused rbm forward pass.

    x:      (B, num_input) float32
    params: output of prepare_params(...) (cacheable), or the raw tuple
            (w1, b1, w2, b2) which is prepared on the fly.
    returns (B, num_input) in out_dtype (default: x.dtype; pass bfloat16 to
    halve the output writeback stream, useful on v5e).
    """
    if len(params) == 4:
        params = prepare_params(*params, compute_dtype=compute_dtype)
    num_input, num_hidden, w1_p, b1_p, w2_p, b2_p = params
    compute_dtype = w1_p.dtype

    B, ni = x.shape
    assert ni == num_input, (ni, num_input)
    ni_p, nh_p = w1_p.shape
    csize = jnp.dtype(compute_dtype).itemsize
    out_dtype = x.dtype if out_dtype is None else out_dtype
    osize = jnp.dtype(out_dtype).itemsize

    vmem_cap = _vmem_capacity_bytes()
    budget = int(0.80 * vmem_cap)

    # ---- batch tile ---------------------------------------------------------
    if batch_tile is None:
        max_tile = 512 if vmem_cap >= (96 << 20) else 256
        if B <= 16:
            batch_tile = _round_up(max(B, 8), 8)
        else:
            # >=2 row tiles so the batch-parallel axis can split across the
            # two v7x TensorCores; pick the tile to minimize last-tile padding.
            n_row = max(2, _cdiv(B, max_tile))
            batch_tile = _round_up(_cdiv(B, n_row), 16)
            if batch_tile > 128:
                bt128 = _round_up(batch_tile, 128)  # MXU-native rows (v5e)
                if n_row * bt128 - B <= bt128 // 2:
                    batch_tile = bt128
    batch_tile = max(8, _round_up(batch_tile, 8))
    B_p = _round_up(B, batch_tile)
    n_row_tiles = B_p // batch_tile

    # ---- resident vs streamed W2 -------------------------------------------
    if n_col_tiles is None:
        if _vmem_needed(batch_tile, ni_p, nh_p, ni_p, 1, csize, osize, 1) <= budget:
            n_col_tiles = 1
        else:
            tn = 128
            for cand in (512, 256, 128):
                if ni_p % cand == 0 and _vmem_needed(
                        batch_tile, ni_p, nh_p, cand, ni_p // cand,
                        csize, osize, 1) <= budget:
                    tn = cand
                    break
            n_col_tiles = ni_p // tn
    tn = ni_p // n_col_tiles
    assert tn * n_col_tiles == ni_p and tn % 128 == 0, (ni_p, n_col_tiles)

    # ---- cost estimate -------------------------------------------------------
    flops = 4 * B_p * ni_p * nh_p
    transcendentals = B_p * nh_p if activation in ("sigmoid", "tanh") else 0
    bytes_accessed = int(
        B_p * ni_p * 4                               # x (f32, read once)
        + (ni_p * nh_p + nh_p * ni_p) * csize        # weights
        + (nh_p + ni_p) * 4                          # biases
        + B_p * ni_p * osize                         # output
    )
    cost = pl.CostEstimate(flops=flops, transcendentals=transcendentals,
                           bytes_accessed=bytes_accessed)

    # x stays f32 (cast to bf16 in-kernel); pad only when actually needed.
    x_p = _pad2d(x, B_p, ni_p)

    def _call(single_buffer_weights):
        # pipeline_mode=Buffered(1): single VMEM copy of grid-invariant blocks.
        wkw = ({"pipeline_mode": pl.Buffered(1)} if single_buffer_weights else {})
        needed = _vmem_needed(batch_tile, ni_p, nh_p, tn, n_col_tiles, csize,
                              osize, 1 if single_buffer_weights else 2)
        vmem_limit = int(min(max(needed, 32 << 20), budget))

        if n_col_tiles == 1:
            grid = (n_row_tiles,)
            in_specs = [
                pl.BlockSpec((batch_tile, ni_p), lambda i: (i, 0)),
                pl.BlockSpec((ni_p, nh_p), lambda i: (0, 0), **wkw),
                pl.BlockSpec((1, nh_p), lambda i: (0, 0), **wkw),
                pl.BlockSpec((nh_p, ni_p), lambda i: (0, 0), **wkw),
                pl.BlockSpec((1, ni_p), lambda i: (0, 0), **wkw),
            ]
            out_specs = pl.BlockSpec((batch_tile, ni_p), lambda i: (i, 0))
            scratch_shapes = ()
            kernel = functools.partial(_rbm_kernel_resident,
                                       activation=activation,
                                       compute_dtype=compute_dtype)
            dims = ("parallel",)
        else:
            grid = (n_row_tiles, n_col_tiles)
            in_specs = [
                pl.BlockSpec((batch_tile, ni_p), lambda i, j: (i, 0)),
                pl.BlockSpec((ni_p, nh_p), lambda i, j: (0, 0), **wkw),
                pl.BlockSpec((1, nh_p), lambda i, j: (0, 0), **wkw),
                pl.BlockSpec((nh_p, tn), lambda i, j: (0, j)),
                pl.BlockSpec((1, tn), lambda i, j: (0, j)),
            ]
            out_specs = pl.BlockSpec((batch_tile, tn), lambda i, j: (i, j))
            scratch_shapes = (pltpu.VMEM((batch_tile, nh_p), compute_dtype),)
            kernel = functools.partial(_rbm_kernel_streamed,
                                       activation=activation,
                                       compute_dtype=compute_dtype)
            dims = ("parallel", "arbitrary")

        out = pl.pallas_call(
            kernel,
            out_shape=jax.ShapeDtypeStruct((B_p, ni_p), out_dtype),
            grid_spec=pltpu.PrefetchScalarGridSpec(
                num_scalar_prefetch=0,
                grid=grid,
                in_specs=in_specs,
                out_specs=out_specs,
                scratch_shapes=scratch_shapes,
            ),
            compiler_params=pltpu.CompilerParams(
                dimension_semantics=dims,
                vmem_limit_bytes=vmem_limit,
            ),
            cost_estimate=cost,
        )(x_p, w1_p, b1_p, w2_p, b2_p)
        return jax.block_until_ready(out)

    try:
        out_p = _call(True)
    except Exception:
        # Older jax without single-buffer pipeline_mode support.
        out_p = _call(False)

    return out_p[:B, :num_input]


def init_params(key, num_input, num_hidden):
    """Mirror the module's init: kaiming-normal (fan_in, a=0) weights,
    PyTorch-Linear-default uniform biases (1-D params are left untouched)."""
    k1, k2, k3, k4 = jax.random.split(key, 4)
    w1 = jax.random.normal(k1, (num_input, num_hidden), jnp.float32) * jnp.sqrt(
        2.0 / num_input)
    w2 = jax.random.normal(k2, (num_hidden, num_input), jnp.float32) * jnp.sqrt(
        2.0 / num_hidden)
    b1 = jax.random.uniform(k3, (num_hidden,), jnp.float32,
                            -1.0 / jnp.sqrt(num_input), 1.0 / jnp.sqrt(num_input))
    b2 = jax.random.uniform(k4, (num_input,), jnp.float32,
                            -1.0 / jnp.sqrt(num_hidden), 1.0 / jnp.sqrt(num_hidden))
    return w1, b1, w2, b2


if __name__ == "__main__":
    # Small shapes implied by the module: x is (batch, num_input).
    # num_hidden deliberately not a multiple of 128 to exercise lane padding.
    batch, num_input, num_hidden = 8, 256, 120
    activation = "relu"

    key = jax.random.PRNGKey(0)
    kx, kp = jax.random.split(key)
    x = jax.random.normal(kx, (batch, num_input), jnp.float32)
    w1, b1, w2, b2 = init_params(kp, num_input, num_hidden)

    # Pad/cast the weights once (cacheable across calls).
    params = prepare_params(w1, b1, w2, b2)

    # Path 1: weights fully VMEM-resident (default at these shapes).
    out = jax.block_until_ready(rbm_forward(x, params, activation=activation))
    assert out.shape == (batch, num_input)

    # Path 2: streamed-W2 large-layer path, forced at small shapes to test it.
    out_s = jax.block_until_ready(
        rbm_forward(x, params, activation=activation, n_col_tiles=2))
    assert out_s.shape == (batch, num_input)

    # Reference 1: same bf16-input / f32-accumulate math in plain JAX.
    bf = lambda a: a.astype(jnp.bfloat16).astype(jnp.float32)
    y1_ref = jnp.maximum(bf(x) @ bf(w1) + b1, 0.0)
    out_ref_bf16 = bf(y1_ref) @ bf(w2) + b2
    assert jnp.allclose(out, out_ref_bf16, atol=1e-2, rtol=1e-2)
    assert jnp.allclose(out_s, out_ref_bf16, atol=1e-2, rtol=1e-2)

    # Reference 2: high-precision f32 reference (relaxed tol for bf16 matmuls).
    hp = jax.lax.Precision.HIGHEST
    y1_f32 = jnp.maximum(jnp.dot(x, w1, precision=hp) + b1, 0.0)
    out_ref_f32 = jnp.dot(y1_f32, w2, precision=hp) + b2
    assert jnp.allclose(out, out_ref_f32, atol=0.15, rtol=0.05)
    assert jnp.allclose(out_s, out_ref_f32, atol=0.15, rtol=0.05)

    # Path 3: documented precision opt-out (f32 compute end-to-end).
    params32 = prepare_params(w1, b1, w2, b2, compute_dtype=jnp.float32)
    out32 = jax.block_until_ready(rbm_forward(x, params32, activation=activation))
    assert jnp.allclose(out32, out_ref_f32, atol=0.05, rtol=0.05)

    print("KERNEL_OK")
</pallas_src>

<mosaic_0001>
module attributes {stable_mosaic.version = 11 : i64} {
  func.func @_rbm_kernel_resident(%arg0: i32, %arg1: memref<8x256xf32, #tpu.memory_space<vmem>>, %arg2: memref<256x128xbf16, #tpu.memory_space<vmem>>, %arg3: memref<1x128xf32, #tpu.memory_space<vmem>>, %arg4: memref<128x256xbf16, #tpu.memory_space<vmem>>, %arg5: memref<1x256xf32, #tpu.memory_space<vmem>>, %arg6: memref<8x256xf32, #tpu.memory_space<vmem>>) attributes {dimension_semantics = [#tpu.dimension_semantics<parallel>], iteration_bounds = array<i64: 1>, scalar_prefetch = 0 : i64, scratch_operands = 0 : i64, tpu.core_type = #tpu.core_type<tc>, window_params = [{transform_indices = @transform_0, window_bounds = array<i64: 8, 256>}, {pipeline_mode = #tpu.pipeline_mode<synchronous>, transform_indices = @transform_1, window_bounds = array<i64: 256, 128>}, {pipeline_mode = #tpu.pipeline_mode<synchronous>, transform_indices = @transform_2, window_bounds = array<i64: 1, 128>}, {pipeline_mode = #tpu.pipeline_mode<synchronous>, transform_indices = @transform_3, window_bounds = array<i64: 128, 256>}, {pipeline_mode = #tpu.pipeline_mode<synchronous>, transform_indices = @transform_4, window_bounds = array<i64: 1, 256>}, {transform_indices = @transform_5, window_bounds = array<i64: 8, 256>}]} {
    %c0 = arith.constant 0 : index
    %c0_0 = arith.constant 0 : index
    %0 = vector.load %arg1[%c0, %c0_0] : memref<8x256xf32, #tpu.memory_space<vmem>>, vector<8x256xf32>
    %1 = arith.truncf %0 : vector<8x256xf32> to vector<8x256xbf16>
    %c0_1 = arith.constant 0 : index
    %c0_2 = arith.constant 0 : index
    %2 = vector.load %arg2[%c0_1, %c0_2] : memref<256x128xbf16, #tpu.memory_space<vmem>>, vector<256x128xbf16>
    %cst = arith.constant dense<0.000000e+00> : vector<8x128xf32>
    %3 = tpu.matmul %1, %2, %cst {dimension_numbers = #tpu.dot_dimension_numbers<[1], [0], [0], [1], [0, 0, 1, 1], [], []>} : vector<8x256xbf16>, vector<256x128xbf16>, vector<8x128xf32> -> vector<8x128xf32>
    %c0_3 = arith.constant 0 : index
    %c0_4 = arith.constant 0 : index
    %4 = vector.load %arg3[%c0_3, %c0_4] : memref<1x128xf32, #tpu.memory_space<vmem>>, vector<1x128xf32>
    %5 = vector.broadcast %4 : vector<1x128xf32> to vector<8x128xf32>
    %6 = arith.addf %3, %5 : vector<8x128xf32>
    %cst_5 = arith.constant 0.000000e+00 : f32
    %7 = vector.broadcast %cst_5 : f32 to vector<8x128xf32>
    %8 = arith.maximumf %6, %7 : vector<8x128xf32>
    %9 = arith.truncf %8 : vector<8x128xf32> to vector<8x128xbf16>
    %c0_6 = arith.constant 0 : index
    %c0_7 = arith.constant 0 : index
    %10 = vector.load %arg4[%c0_6, %c0_7] : memref<128x256xbf16, #tpu.memory_space<vmem>>, vector<128x256xbf16>
    %cst_8 = arith.constant dense<0.000000e+00> : vector<8x256xf32>
    %11 = tpu.matmul %9, %10, %cst_8 {dimension_numbers = #tpu.dot_dimension_numbers<[1], [0], [0], [1], [0, 0, 1, 1], [], []>} : vector<8x128xbf16>, vector<128x256xbf16>, vector<8x256xf32> -> vector<8x256xf32>
    %c0_9 = arith.constant 0 : index
    %c0_10 = arith.constant 0 : index
    %12 = vector.load %arg5[%c0_9, %c0_10] : memref<1x256xf32, #tpu.memory_space<vmem>>, vector<1x256xf32>
    %13 = vector.broadcast %12 : vector<1x256xf32> to vector<8x256xf32>
    %14 = arith.addf %11, %13 : vector<8x256xf32>
    %c0_11 = arith.constant 0 : index
    %c0_12 = arith.constant 0 : index
    %15 = vector.load %arg6[%c0_11, %c0_12] : memref<8x256xf32, #tpu.memory_space<vmem>>, vector<8x256xf32>
    tpu.vector_store %arg6[%c0_11, %c0_12], %14 {strides = array<i32>} : memref<8x256xf32, #tpu.memory_space<vmem>>, vector<8x256xf32>,
    return
  }
  func.func @transform_0(%arg0: i32) -> (i32, i32) {
    %c0_i32 = arith.constant 0 : i32
    %c0_i32_0 = arith.constant 0 : i32
    return %arg0, %c0_i32 : i32, i32
  }
  func.func @transform_1(%arg0: i32) -> (i32, i32) {
    %c0_i32 = arith.constant 0 : i32
    %c0_i32_0 = arith.constant 0 : i32
    %c0_i32_1 = arith.constant 0 : i32
    return %c0_i32, %c0_i32_0 : i32, i32
  }
  func.func @transform_2(%arg0: i32) -> (i32, i32) {
    %c0_i32 = arith.constant 0 : i32
    %c0_i32_0 = arith.constant 0 : i32
    %c0_i32_1 = arith.constant 0 : i32
    return %c0_i32, %c0_i32_0 : i32, i32
  }
  func.func @transform_3(%arg0: i32) -> (i32, i32) {
    %c0_i32 = arith.constant 0 : i32
    %c0_i32_0 = arith.constant 0 : i32
    %c0_i32_1 = arith.constant 0 : i32
    return %c0_i32, %c0_i32_0 : i32, i32
  }
  func.func @transform_4(%arg0: i32) -> (i32, i32) {
    %c0_i32 = arith.constant 0 : i32
    %c0_i32_0 = arith.constant 0 : i32
    %c0_i32_1 = arith.constant 0 : i32
    return %c0_i32, %c0_i32_0 : i32, i32
  }
  func.func @transform_5(%arg0: i32) -> (i32, i32) {
    %c0_i32 = arith.constant 0 : i32
    %c0_i32_0 = arith.constant 0 : i32
    return %arg0, %c0_i32 : i32, i32
  }
}

module attributes {stable_mosaic.version = 11 : i64} {
  func.func @_rbm_kernel_resident(%arg0: i32, %arg1: memref<8x256xf32, #tpu.memory_space<vmem>>, %arg2: memref<256x128xbf16, #tpu.memory_space<vmem>>, %arg3: memref<1x128xf32, #tpu.memory_space<vmem>>, %arg4: memref<128x256xbf16, #tpu.memory_space<vmem>>, %arg5: memref<1x256xf32, #tpu.memory_space<vmem>>, %arg6: memref<8x256xf32, #tpu.memory_space<vmem>>) attributes {dimension_semantics = [#tpu.dimension_semantics<parallel>], iteration_bounds = array<i64: 1>, scalar_prefetch = 0 : i64, scratch_operands = 0 : i64, tpu.core_type = #tpu.core_type<tc>, window_params = [{transform_indices = @transform_0, window_bounds = array<i64: 8, 256>}, {pipeline_mode = #tpu.pipeline_mode<synchronous>, transform_indices = @transform_1, window_bounds = array<i64: 256, 128>}, {pipeline_mode = #tpu.pipeline_mode<synchronous>, transform_indices = @transform_2, window_bounds = array<i64: 1, 128>}, {pipeline_mode = #tpu.pipeline_mode<synchronous>, transform_indices = @transform_3, window_bounds = array<i64: 128, 256>}, {pipeline_mode = #tpu.pipeline_mode<synchronous>, transform_indices = @transform_4, window_bounds = array<i64: 1, 256>}, {transform_indices = @transform_5, window_bounds = array<i64: 8, 256>}]} {
    %c0 = arith.constant 0 : index
    %c0_0 = arith.constant 0 : index
    %0 = vector.load %arg1[%c0, %c0_0] : memref<8x256xf32, #tpu.memory_space<vmem>>, vector<8x256xf32>
    %1 = arith.truncf %0 : vector<8x256xf32> to vector<8x256xbf16>
    %c0_1 = arith.constant 0 : index
    %c0_2 = arith.constant 0 : index
    %2 = vector.load %arg2[%c0_1, %c0_2] : memref<256x128xbf16, #tpu.memory_space<vmem>>, vector<256x128xbf16>
    %cst = arith.constant dense<0.000000e+00> : vector<8x128xf32>
    %3 = tpu.matmul %1, %2, %cst {dimension_numbers = #tpu.dot_dimension_numbers<[1], [0], [0], [1], [0, 0, 1, 1], [], []>} : vector<8x256xbf16>, vector<256x128xbf16>, vector<8x128xf32> -> vector<8x128xf32>
    %c0_3 = arith.constant 0 : index
    %c0_4 = arith.constant 0 : index
    %4 = vector.load %arg3[%c0_3, %c0_4] : memref<1x128xf32, #tpu.memory_space<vmem>>, vector<1x128xf32>
    %5 = vector.broadcast %4 : vector<1x128xf32> to vector<8x128xf32>
    %6 = arith.addf %3, %5 : vector<8x128xf32>
    %cst_5 = arith.constant 0.000000e+00 : f32
    %7 = vector.broadcast %cst_5 : f32 to vector<8x128xf32>
    %8 = arith.maximumf %6, %7 : vector<8x128xf32>
    %9 = arith.truncf %8 : vector<8x128xf32> to vector<8x128xbf16>
    %c0_6 = arith.constant 0 : index
    %c0_7 = arith.constant 0 : index
    %10 = vector.load %arg4[%c0_6, %c0_7] : memref<128x256xbf16, #tpu.memory_space<vmem>>, vector<128x256xbf16>
    %cst_8 = arith.constant dense<0.000000e+00> : vector<8x256xf32>
    %11 = tpu.matmul %9, %10, %cst_8 {dimension_numbers = #tpu.dot_dimension_numbers<[1], [0], [0], [1], [0, 0, 1, 1], [], []>} : vector<8x128xbf16>, vector<128x256xbf16>, vector<8x256xf32> -> vector<8x256xf32>
    %c0_9 = arith.constant 0 : index
    %c0_10 = arith.constant 0 : index
    %12 = vector.load %arg5[%c0_9, %c0_10] : memref<1x256xf32, #tpu.memory_space<vmem>>, vector<1x256xf32>
    %13 = vector.broadcast %12 : vector<1x256xf32> to vector<8x256xf32>
    %14 = arith.addf %11, %13 : vector<8x256xf32>
    %c0_11 = arith.constant 0 : index
    %c0_12 = arith.constant 0 : index
    %15 = vector.load %arg6[%c0_11, %c0_12] : memref<8x256xf32, #tpu.memory_space<vmem>>, vector<8x256xf32>
    tpu.vector_store %arg6[%c0_11, %c0_12], %14 {strides = array<i32>} : memref<8x256xf32, #tpu.memory_space<vmem>>, vector<8x256xf32>,
    return
  }
  func.func @transform_0(%arg0: i32) -> (i32, i32) {
    %c0_i32 = arith.constant 0 : i32
    %c0_i32_0 = arith.constant 0 : i32
    return %arg0, %c0_i32 : i32, i32
  }
  func.func @transform_1(%arg0: i32) -> (i32, i32) {
    %c0_i32 = arith.constant 0 : i32
    %c0_i32_0 = arith.constant 0 : i32
    %c0_i32_1 = arith.constant 0 : i32
    return %c0_i32, %c0_i32_0 : i32, i32
  }
  func.func @transform_2(%arg0: i32) -> (i32, i32) {
    %c0_i32 = arith.constant 0 : i32
    %c0_i32_0 = arith.constant 0 : i32
    %c0_i32_1 = arith.constant 0 : i32
    return %c0_i32, %c0_i32_0 : i32, i32
  }
  func.func @transform_3(%arg0: i32) -> (i32, i32) {
    %c0_i32 = arith.constant 0 : i32
    %c0_i32_0 = arith.constant 0 : i32
    %c0_i32_1 = arith.constant 0 : i32
    return %c0_i32, %c0_i32_0 : i32, i32
  }
  func.func @transform_4(%arg0: i32) -> (i32, i32) {
    %c0_i32 = arith.constant 0 : i32
    %c0_i32_0 = arith.constant 0 : i32
    %c0_i32_1 = arith.constant 0 : i32
    return %c0_i32, %c0_i32_0 : i32, i32
  }
  func.func @transform_5(%arg0: i32) -> (i32, i32) {
    %c0_i32 = arith.constant 0 : i32
    %c0_i32_0 = arith.constant 0 : i32
    return %arg0, %c0_i32 : i32, i32
  }
}

</mosaic_0001>

<llo_original>
// kernel: tpu_custom_call.1
$region0: #{tpu_custom_call.1}
  #allocation0 [shape = 'u32[]', space=smem, size = 0x4, offset = 0x4, fixed_abs, tag = 'smem constant byte address 0x4 - core index']
  #allocation1 [shape = 'u32[144,128]{1,0:T(1,128)}', space=vmem, size = 0x12000, scoped, tag = 'internal scratch']
  %s0 = inlined_call_operand.hbm [shape: f32[8,256], index: 0, kind: input, shape index: {}]
  %s1 = inlined_call_operand.hbm [shape: bf16[256,128], index: 1, kind: input, shape index: {}]
  %s2 = inlined_call_operand.vmem [shape: f32[1,128], index: 2, kind: input, shape index: {}]
  %s3 = inlined_call_operand.hbm [shape: bf16[128,256], index: 3, kind: input, shape index: {}]
  %s4 = inlined_call_operand.vmem [shape: f32[1,256], index: 4, kind: input, shape index: {}]
  %s5 = inlined_call_operand.hbm [shape: f32[8,256], index: 5, kind: output, shape index: {}]
  %s6 = sld [smem:[#allocation0]]
  $region42: #{tpu_custom_call.1} parent=0
    _
  %s8 = ssub.s32 1, %s6
  %s9 = scalar_select 0, %s8, %s6
  $region1: #{tpu_custom_call.1} parent=0
    #allocation2 [shape = 'u8[8192]{0}', space=vmem, size = 0x2000, scoped, tag = 'input window, operand 0, single buffered']
    #allocation3 [shape = 's32[1]{0}', space=sflag, size = 0x4, scoped, tag = 'scoped memory for tpu_custom_call.1']
    #allocation4 [shape = 's32[1]{0}', space=sflag, size = 0x4, scoped, tag = 'scoped memory for tpu_custom_call.1']
    #allocation5 [shape = 'u8[65536]{0}', space=vmem, size = 0x10000, scoped, tag = 'input window, operand 1, single buffered']
    #allocation6 [shape = 's32[1]{0}', space=sflag, size = 0x4, scoped, tag = 'scoped memory for tpu_custom_call.1']
    #allocation7 [shape = 'u8[65536]{0}', space=vmem, size = 0x10000, scoped, tag = 'input window, operand 3, single buffered']
    #allocation8 [shape = 'u8[8192]{0}', space=vmem, size = 0x2000, scoped, tag = 'output window, operand 0, single buffered']
    %10 = vsyncpa [#allocation3], 0
    %11 = vsyncpa [#allocation6], 0
    %12 = vsyncpa [#allocation4], 0
    // Predicated region
    $region2: #{tpu_custom_call.1} parent=1 // pred_check
      _
    $region3: #{tpu_custom_call.1} parent=1 // pred_check_branch
      %14 = sbr.rel (0) target = $region5
    $region4: #{tpu_custom_call.1} parent=1 // pred_region
      %s16 = ssub.s32 256, 256
      %17 = vsyncadd [#allocation3], %s16
      %s19 = sshll.u32 [#allocation2], 4
      %s20 = int_to_ptr.vmem [resolvable:$true] %s19
      %22 = dma.hbm_to_vmem [thread:$0]  %s0, 256, %s20, [#allocation3]
    $region5: #{tpu_custom_call.1} parent=1 // pred_fallthru
      _
    // Predicated region
    $region6: #{tpu_custom_call.1} parent=1 // pred_check
      _
    $region7: #{tpu_custom_call.1} parent=1 // pred_check_branch
      %24 = sbr.rel (0) target = $region9
    $region8: #{tpu_custom_call.1} parent=1 // pred_region
      %s26 = ssub.s32 2048, 2048
      %27 = vsyncadd [#allocation6], %s26
      %s28 = sshll.u32 [#allocation5], 4
      %s29 = int_to_ptr.vmem [resolvable:$true] %s28
      %34 = dma.hbm_to_vmem [thread:$0]  %s1, 2048, %s29, [#allocation6], 64, 64, 4
    $region9: #{tpu_custom_call.1} parent=1 // pred_fallthru
      _
    // Predicated region
    $region10: #{tpu_custom_call.1} parent=1 // pred_check
      _
    $region11: #{tpu_custom_call.1} parent=1 // pred_check_branch
      %36 = sbr.rel (0) target = $region13
    $region12: #{tpu_custom_call.1} parent=1 // pred_region
      _
    $region13: #{tpu_custom_call.1} parent=1 // pred_fallthru
      _
    // Predicated region
    $region14: #{tpu_custom_call.1} parent=1 // pred_check
      _
    $region15: #{tpu_custom_call.1} parent=1 // pred_check_branch
      %38 = sbr.rel (0) target = $region17
    $region16: #{tpu_custom_call.1} parent=1 // pred_region
      %s40 = ssub.s32 2048, 2048
      %41 = vsyncadd [#allocation6], %s40
      %s42 = sshll.u32 [#allocation7], 4
      %s43 = int_to_ptr.vmem [resolvable:$true] %s42
      %48 = dma.hbm_to_vmem [thread:$0]  %s3, 2048, %s43, [#allocation6], 128, 128, 8
    $region17: #{tpu_custom_call.1} parent=1 // pred_fallthru
      _
    // Predicated region
    $region18: #{tpu_custom_call.1} parent=1 // pred_check
      _
    $region19: #{tpu_custom_call.1} parent=1 // pred_check_branch
      %50 = sbr.rel (0) target = $region21
    $region20: #{tpu_custom_call.1} parent=1 // pred_region
      _
    $region21: #{tpu_custom_call.1} parent=1 // pred_fallthru
      _
    // Predicated region
    $region22: #{tpu_custom_call.1} parent=1 // pred_check
      _
    $region23: #{tpu_custom_call.1} parent=1 // pred_check_branch
      %52 = sbr.rel (0) target = $region25
    $region24: #{tpu_custom_call.1} parent=1 // pred_region
      %53 = dma.done [#allocation3], 256
    $region25: #{tpu_custom_call.1} parent=1 // pred_fallthru
      _
    // Predicated region
    $region26: #{tpu_custom_call.1} parent=1 // pred_check
      _
    $region27: #{tpu_custom_call.1} parent=1 // pred_check_branch
      %55 = sbr.rel (0) target = $region29
    $region28: #{tpu_custom_call.1} parent=1 // pred_region
      %56 = dma.done [#allocation6], 2048
    $region29: #{tpu_custom_call.1} parent=1 // pred_fallthru
      _
    // Predicated region
    $region30: #{tpu_custom_call.1} parent=1 // pred_check
      _
    $region31: #{tpu_custom_call.1} parent=1 // pred_check_branch
      %58 = sbr.rel (0) target = $region33
    $region32: #{tpu_custom_call.1} parent=1 // pred_region
      %59 = dma.done [#allocation6], 2048
    $region33: #{tpu_custom_call.1} parent=1 // pred_fallthru
      _
    %v61 = vld [vmem:[#allocation2] sm:$0xff]
    %v62 = vld [vmem:[#allocation2 + $0x8] sm:$0xff]
    %v63 = vpack.c.bf16 %v61, %v61
    %v64 = vpack.c.bf16 %v62, %v62
    %v65 = vld [vmem:[#allocation5] sm:$0xf]
    %v66 = vld [vmem:[#allocation5 + $0x4] sm:$0xf]
    %v67 = vld [vmem:[#allocation5 + $0x8] sm:$0xf]
    %v68 = vld [vmem:[#allocation5 + $0xc] sm:$0xf]
    %v69 = vld [vmem:[#allocation5 + $0x10] sm:$0xf]
    %v70 = vld [vmem:[#allocation5 + $0x14] sm:$0xf]
    %v71 = vld [vmem:[#allocation5 + $0x18] sm:$0xf]
    %v72 = vld [vmem:[#allocation5 + $0x1c] sm:$0xf]
    %v73 = vld [vmem:[#allocation5 + $0x20] sm:$0xf]
    %v74 = vld [vmem:[#allocation5 + $0x24] sm:$0xf]
    %v75 = vld [vmem:[#allocation5 + $0x28] sm:$0xf]
    %v76 = vld [vmem:[#allocation5 + $0x2c] sm:$0xf]
    %v77 = vld [vmem:[#allocation5 + $0x30] sm:$0xf]
    %v78 = vld [vmem:[#allocation5 + $0x34] sm:$0xf]
    %v79 = vld [vmem:[#allocation5 + $0x38] sm:$0xf]
    %v80 = vld [vmem:[#allocation5 + $0x3c] sm:$0xf]
    %v81 = vld [vmem:[#allocation5 + $0x40] sm:$0xf]
    %v82 = vld [vmem:[#allocation5 + $0x44] sm:$0xf]
    %v83 = vld [vmem:[#allocation5 + $0x48] sm:$0xf]
    %v84 = vld [vmem:[#allocation5 + $0x4c] sm:$0xf]
    %v85 = vld [vmem:[#allocation5 + $0x50] sm:$0xf]
    %v86 = vld [vmem:[#allocation5 + $0x54] sm:$0xf]
    %v87 = vld [vmem:[#allocation5 + $0x58] sm:$0xf]
    %v88 = vld [vmem:[#allocation5 + $0x5c] sm:$0xf]
    %v89 = vld [vmem:[#allocation5 + $0x60] sm:$0xf]
    %v90 = vld [vmem:[#allocation5 + $0x64] sm:$0xf]
    %v91 = vld [vmem:[#allocation5 + $0x68] sm:$0xf]
    %v92 = vld [vmem:[#allocation5 + $0x6c] sm:$0xf]
    %v93 = vld [vmem:[#allocation5 + $0x70] sm:$0xf]
    %v94 = vld [vmem:[#allocation5 + $0x74] sm:$0xf]
    %v95 = vld [vmem:[#allocation5 + $0x78] sm:$0xf]
    %v96 = vld [vmem:[#allocation5 + $0x7c] sm:$0xf]
    %v97 = vld [vmem:[%s2] sm:$0x1]
    %v99 = vlaneseq
    %v100 = vshrl.u32 %v99, 7
    %v101 = vsub.s32 0, %v100
    %v102 = vrot.slane %v97, %v101
    %v136 = vunpack.c.l.b16 %v65
    %v137 = vunpack.c.l.b16 %v66
    %v138 = vunpack.c.l.b16 %v67
    %v139 = vunpack.c.l.b16 %v68
    %v140 = vunpack.c.l.b16 %v69
    %v141 = vunpack.c.l.b16 %v70
    %v142 = vunpack.c.l.b16 %v71
    %v143 = vunpack.c.l.b16 %v72
    %v144 = vunpack.c.l.b16 %v73
    %v145 = vunpack.c.l.b16 %v74
    %v146 = vunpack.c.l.b16 %v75
    %v147 = vunpack.c.l.b16 %v76
    %v148 = vunpack.c.l.b16 %v77
    %v149 = vunpack.c.l.b16 %v78
    %v150 = vunpack.c.l.b16 %v79
    %v151 = vunpack.c.l.b16 %v80
    %v152 = vunpack.c.l.b16 %v81
    %v153 = vunpack.c.l.b16 %v82
    %v154 = vunpack.c.l.b16 %v83
    %v155 = vunpack.c.l.b16 %v84
    %v156 = vunpack.c.l.b16 %v85
    %v157 = vunpack.c.l.b16 %v86
    %v158 = vunpack.c.l.b16 %v87
    %v159 = vunpack.c.l.b16 %v88
    %v160 = vunpack.c.l.b16 %v89
    %v161 = vunpack.c.l.b16 %v90
    %v162 = vunpack.c.l.b16 %v91
    %v163 = vunpack.c.l.b16 %v92
    %v164 = vunpack.c.l.b16 %v93
    %v165 = vunpack.c.l.b16 %v94
    %v166 = vunpack.c.l.b16 %v95
    %v167 = vunpack.c.l.b16 %v96
    %v168 = vpack.c.b16 %v137, %v136
    %v169 = vpack.c.b16 %v139, %v138
    %v170 = vpack.c.b16 %v141, %v140
    %v171 = vpack.c.b16 %v143, %v142
    %v172 = vpack.c.b16 %v145, %v144
    %v173 = vpack.c.b16 %v147, %v146
    %v174 = vpack.c.b16 %v149, %v148
    %v175 = vpack.c.b16 %v151, %v150
    %v176 = vpack.c.b16 %v153, %v152
    %v177 = vpack.c.b16 %v155, %v154
    %v178 = vpack.c.b16 %v157, %v156
    %v179 = vpack.c.b16 %v159, %v158
    %v180 = vpack.c.b16 %v161, %v160
    %v181 = vpack.c.b16 %v163, %v162
    %v182 = vpack.c.b16 %v165, %v164
    %v183 = vpack.c.b16 %v167, %v166
    %200 = vmatprep.subr.bf16.mxu0 0
    %201 = vmatpush1.bf16.msra.mxu0 %v168
    %202 = vmatprep.subr.bf16.mxu0 0
    %203 = vmatpush1.bf16.msra.mxu0 %v169
    %204 = vmatprep.subr.bf16.mxu0 0
    %205 = vmatpush1.bf16.msra.mxu0 %v170
    %206 = vmatprep.subr.bf16.mxu0 0
    %207 = vmatpush1.bf16.msra.mxu0 %v171
    %208 = vmatprep.subr.bf16.mxu0 0
    %209 = vmatpush1.bf16.msra.mxu0 %v172
    %210 = vmatprep.subr.bf16.mxu0 0
    %211 = vmatpush1.bf16.msra.mxu0 %v173
    %212 = vmatprep.subr.bf16.mxu0 0
    %213 = vmatpush1.bf16.msra.mxu0 %v174
    %214 = vmatprep.subr.bf16.mxu0 0
    %215 = vmatpush1.bf16.msra.mxu0 %v175
    %216 = vmatprep.subr.bf16.mxu0 0
    %217 = vmatpush1.bf16.msra.mxu0 %v176
    %218 = vmatprep.subr.bf16.mxu0 0
    %219 = vmatpush1.bf16.msra.mxu0 %v177
    %220 = vmatprep.subr.bf16.mxu0 0
    %221 = vmatpush1.bf16.msra.mxu0 %v178
    %222 = vmatprep.subr.bf16.mxu0 0
    %223 = vmatpush1.bf16.msra.mxu0 %v179
    %224 = vmatprep.subr.bf16.mxu0 0
    %225 = vmatpush1.bf16.msra.mxu0 %v180
    %226 = vmatprep.subr.bf16.mxu0 0
    %227 = vmatpush1.bf16.msra.mxu0 %v181
    %228 = vmatprep.subr.bf16.mxu0 0
    %229 = vmatpush1.bf16.msra.mxu0 %v182
    %230 = vmatprep.subr.bf16.mxu0 0
    %231 = vmatpush1.bf16.msra.mxu0 %v183
    %232 = vmatprep.mubr.bf16.mxu0 %v64
    %233 = vmatmul.mubr.bf16.gmra.mrb[0].mxu0 %v63
    %v234 = vpop.f32.mrb[0].mxu0
    %v235 = vadd.f32 %v102, %v234
    %v236 = vpop.f32.mrb[0].mxu0
    %v237 = vpop.f32.mrb[0].mxu0
    %v238 = vpop.f32.mrb[0].mxu0
    %239 = vdwg.mxu0
    %v240 = vmax.f32 %v235, 0.0
    %v241 = vpack.c.bf16 %v240, %v240
    %v242 = vld [vmem:[#allocation7] sm:$0xff]
    %v243 = vld [vmem:[#allocation7 + $0x8] sm:$0xff]
    %v244 = vld [vmem:[#allocation7 + $0x10] sm:$0xff]
    %v245 = vld [vmem:[#allocation7 + $0x18] sm:$0xff]
    %v246 = vld [vmem:[#allocation7 + $0x20] sm:$0xff]
    %v247 = vld [vmem:[#allocation7 + $0x28] sm:$0xff]
    %v248 = vld [vmem:[#allocation7 + $0x30] sm:$0xff]
    %v249 = vld [vmem:[#allocation7 + $0x38] sm:$0xff]
    %v250 = vld [vmem:[#allocation7 + $0x40] sm:$0xff]
    %v251 = vld [vmem:[#allocation7 + $0x48] sm:$0xff]
    %v252 = vld [vmem:[#allocation7 + $0x50] sm:$0xff]
    %v253 = vld [vmem:[#allocation7 + $0x58] sm:$0xff]
    %v254 = vld [vmem:[#allocation7 + $0x60] sm:$0xff]
    %v255 = vld [vmem:[#allocation7 + $0x68] sm:$0xff]
    %v256 = vld [vmem:[#allocation7 + $0x70] sm:$0xff]
    %v257 = vld [vmem:[#allocation7 + $0x78] sm:$0xff]
    %v258 = vld [vmem:[%s4] sm:$0x3]
    %v260 = vlaneseq
    %v261 = vshrl.u32 %v260, 7
    %v262 = vsub.s32 0, %v261
    %v263 = vrot.slane %v258, %v262
    %v264 = vlaneseq
    %v265 = vshrl.u32 %v264, 7
    %v266 = vsub.s32 1, %v265
    %v267 = vrot.slane %v258, %v266
    %v286 = vunpack.c.l.b16 %v242
    %v287 = vunpack.c.h.b16 %v242
    %v288 = vunpack.c.l.b16 %v243
    %v289 = vunpack.c.h.b16 %v243
    %v290 = vunpack.c.l.b16 %v244
    %v291 = vunpack.c.h.b16 %v244
    %v292 = vunpack.c.l.b16 %v245
    %v293 = vunpack.c.h.b16 %v245
    %v294 = vunpack.c.l.b16 %v246
    %v295 = vunpack.c.h.b16 %v246
    %v296 = vunpack.c.l.b16 %v247
    %v297 = vunpack.c.h.b16 %v247
    %v298 = vunpack.c.l.b16 %v248
    %v299 = vunpack.c.h.b16 %v248
    %v300 = vunpack.c.l.b16 %v249
    %v301 = vunpack.c.h.b16 %v249
    %v302 = vunpack.c.l.b16 %v250
    %v303 = vunpack.c.h.b16 %v250
    %v304 = vunpack.c.l.b16 %v251
    %v305 = vunpack.c.h.b16 %v251
    %v306 = vunpack.c.l.b16 %v252
    %v307 = vunpack.c.h.b16 %v252
    %v308 = vunpack.c.l.b16 %v253
    %v309 = vunpack.c.h.b16 %v253
    %v310 = vunpack.c.l.b16 %v254
    %v311 = vunpack.c.h.b16 %v254
    %v312 = vunpack.c.l.b16 %v255
    %v313 = vunpack.c.h.b16 %v255
    %v314 = vunpack.c.l.b16 %v256
    %v315 = vunpack.c.h.b16 %v256
    %v316 = vunpack.c.l.b16 %v257
    %v317 = vunpack.c.h.b16 %v257
    %v318 = vpack.c.b16 %v288, %v286
    %v319 = vpack.c.b16 %v289, %v287
    %v320 = vpack.c.b16 %v292, %v290
    %v321 = vpack.c.b16 %v293, %v291
    %v322 = vpack.c.b16 %v296, %v294
    %v323 = vpack.c.b16 %v297, %v295
    %v324 = vpack.c.b16 %v300, %v298
    %v325 = vpack.c.b16 %v301, %v299
    %v326 = vpack.c.b16 %v304, %v302
    %v327 = vpack.c.b16 %v305, %v303
    %v328 = vpack.c.b16 %v308, %v306
    %v329 = vpack.c.b16 %v309, %v307
    %v330 = vpack.c.b16 %v312, %v310
    %v331 = vpack.c.b16 %v313, %v311
    %v332 = vpack.c.b16 %v316, %v314
    %v333 = vpack.c.b16 %v317, %v315
    %350 = vmatprep.subr.bf16.mxu0 %v319
    %351 = vmatpush1.bf16.msra.mxu0 %v318
    %352 = vmatprep.subr.bf16.mxu0 %v321
    %353 = vmatpush1.bf16.msra.mxu0 %v320
    %354 = vmatprep.subr.bf16.mxu0 %v323
    %355 = vmatpush1.bf16.msra.mxu0 %v322
    %356 = vmatprep.subr.bf16.mxu0 %v325
    %357 = vmatpush1.bf16.msra.mxu0 %v324
    %358 = vmatprep.subr.bf16.mxu0 %v327
    %359 = vmatpush1.bf16.msra.mxu0 %v326
    %360 = vmatprep.subr.bf16.mxu0 %v329
    %361 = vmatpush1.bf16.msra.mxu0 %v328
    %362 = vmatprep.subr.bf16.mxu0 %v331
    %363 = vmatpush1.bf16.msra.mxu0 %v330
    %364 = vmatprep.subr.bf16.mxu0 %v333
    %365 = vmatpush1.bf16.msra.mxu0 %v332
    %366 = vmatprep.subr.bf16.mxu0 0
    %367 = vmatpush1.bf16.msra.mxu0 0
    %368 = vmatprep.subr.bf16.mxu0 0
    %369 = vmatpush1.bf16.msra.mxu0 0
    %370 = vmatprep.subr.bf16.mxu0 0
    %371 = vmatpush1.bf16.msra.mxu0 0
    %372 = vmatprep.subr.bf16.mxu0 0
    %373 = vmatpush1.bf16.msra.mxu0 0
    %374 = vmatprep.subr.bf16.mxu0 0
    %375 = vmatpush1.bf16.msra.mxu0 0
    %376 = vmatprep.subr.bf16.mxu0 0
    %377 = vmatpush1.bf16.msra.mxu0 0
    %378 = vmatprep.subr.bf16.mxu0 0
    %379 = vmatpush1.bf16.msra.mxu0 0
    %380 = vmatprep.subr.bf16.mxu0 0
    %381 = vmatpush1.bf16.msra.mxu0 0
    %382 = vmatprep.mubr.bf16.mxu0 0
    %383 = vmatmul.mubr.bf16.gmra.mrb[0].mxu0 %v241
    %v384 = vpop.f32.mrb[0].mxu0
    %v385 = vadd.f32 %v263, %v384
    %v386 = vpop.f32.mrb[0].mxu0
    %v387 = vadd.f32 %v267, %v386
    %v388 = vpop.f32.mrb[0].mxu0
    %v389 = vpop.f32.mrb[0].mxu0
    %390 = vdwg.mxu0
    %391 = vst [vmem:[#allocation8] sm:$0xff] %v385
    %392 = vst [vmem:[#allocation8 + $0x8] sm:$0xff] %v387
    // Predicated region
    $region34: #{tpu_custom_call.1} parent=1 // pred_check
      _
    $region35: #{tpu_custom_call.1} parent=1 // pred_check_branch
      %394 = sbr.rel (0) target = $region37
    $region36: #{tpu_custom_call.1} parent=1 // pred_region
      %s396 = ssub.s32 256, 256
      %397 = vsyncadd [#allocation4], %s396
      %s399 = sshll.u32 [#allocation8], 4
      %s400 = int_to_ptr.vmem [resolvable:$true] %s399
      %402 = dma.vmem_to_hbm [thread:$0]  %s400, 256, %s5, [#allocation4]
    $region37: #{tpu_custom_call.1} parent=1 // pred_fallthru
      _
    // Predicated region
    $region38: #{tpu_custom_call.1} parent=1 // pred_check
      _
    $region39: #{tpu_custom_call.1} parent=1 // pred_check_branch
      %404 = sbr.rel (0) target = $region41
    $region40: #{tpu_custom_call.1} parent=1 // pred_region
      %405 = dma.done [#allocation4], 256
    $region41: #{tpu_custom_call.1} parent=1 // pred_fallthru
      _
    %406 = vsyncpa [#allocation3], 1
    %407 = vsyncpa [#allocation6], 1
    %408 = vsyncpa [#allocation4], 1

// kernel: tpu_custom_call.1
$region0: #{tpu_custom_call.1}
  #allocation0 [shape = 'u32[]', space=smem, size = 0x4, offset = 0x4, fixed_abs, tag = 'smem constant byte address 0x4 - core index']
  #allocation1 [shape = 'u32[144,128]{1,0:T(1,128)}', space=vmem, size = 0x12000, scoped, tag = 'internal scratch']
  %s0 = inlined_call_operand.hbm [shape: f32[8,256], index: 0, kind: input, shape index: {}]
  %s1 = inlined_call_operand.hbm [shape: bf16[256,128], index: 1, kind: input, shape index: {}]
  %s2 = inlined_call_operand.vmem [shape: f32[1,128], index: 2, kind: input, shape index: {}]
  %s3 = inlined_call_operand.hbm [shape: bf16[128,256], index: 3, kind: input, shape index: {}]
  %s4 = inlined_call_operand.vmem [shape: f32[1,256], index: 4, kind: input, shape index: {}]
  %s5 = inlined_call_operand.hbm [shape: f32[8,256], index: 5, kind: output, shape index: {}]
  %s6 = sld [smem:[#allocation0]]
  $region42: #{tpu_custom_call.1} parent=0
    _
  %s8 = ssub.s32 1, %s6
  %s9 = scalar_select 0, %s8, %s6
  $region1: #{tpu_custom_call.1} parent=0
    #allocation2 [shape = 'u8[8192]{0}', space=vmem, size = 0x2000, scoped, tag = 'input window, operand 0, single buffered']
    #allocation3 [shape = 's32[1]{0}', space=sflag, size = 0x4, scoped, tag = 'scoped memory for tpu_custom_call.1']
    #allocation4 [shape = 's32[1]{0}', space=sflag, size = 0x4, scoped, tag = 'scoped memory for tpu_custom_call.1']
    #allocation5 [shape = 'u8[65536]{0}', space=vmem, size = 0x10000, scoped, tag = 'input window, operand 1, single buffered']
    #allocation6 [shape = 's32[1]{0}', space=sflag, size = 0x4, scoped, tag = 'scoped memory for tpu_custom_call.1']
    #allocation7 [shape = 'u8[65536]{0}', space=vmem, size = 0x10000, scoped, tag = 'input window, operand 3, single buffered']
    #allocation8 [shape = 'u8[8192]{0}', space=vmem, size = 0x2000, scoped, tag = 'output window, operand 0, single buffered']
    %10 = vsyncpa [#allocation3], 0
    %11 = vsyncpa [#allocation6], 0
    %12 = vsyncpa [#allocation4], 0
    // Predicated region
    $region2: #{tpu_custom_call.1} parent=1 // pred_check
      _
    $region3: #{tpu_custom_call.1} parent=1 // pred_check_branch
      %14 = sbr.rel (0) target = $region5
    $region4: #{tpu_custom_call.1} parent=1 // pred_region
      %s16 = ssub.s32 256, 256
      %17 = vsyncadd [#allocation3], %s16
      %s19 = sshll.u32 [#allocation2], 4
      %s20 = int_to_ptr.vmem [resolvable:$true] %s19
      %22 = dma.hbm_to_vmem [thread:$0]  %s0, 256, %s20, [#allocation3]
    $region5: #{tpu_custom_call.1} parent=1 // pred_fallthru
      _
    // Predicated region
    $region6: #{tpu_custom_call.1} parent=1 // pred_check
      _
    $region7: #{tpu_custom_call.1} parent=1 // pred_check_branch
      %24 = sbr.rel (0) target = $region9
    $region8: #{tpu_custom_call.1} parent=1 // pred_region
      %s26 = ssub.s32 2048, 2048
      %27 = vsyncadd [#allocation6], %s26
      %s28 = sshll.u32 [#allocation5], 4
      %s29 = int_to_ptr.vmem [resolvable:$true] %s28
      %34 = dma.hbm_to_vmem [thread:$0]  %s1, 2048, %s29, [#allocation6], 64, 64, 4
    $region9: #{tpu_custom_call.1} parent=1 // pred_fallthru
      _
    // Predicated region
    $region10: #{tpu_custom_call.1} parent=1 // pred_check
      _
    $region11: #{tpu_custom_call.1} parent=1 // pred_check_branch
      %36 = sbr.rel (0) target = $region13
    $region12: #{tpu_custom_call.1} parent=1 // pred_region
      _
    $region13: #{tpu_custom_call.1} parent=1 // pred_fallthru
      _
    // Predicated region
    $region14: #{tpu_custom_call.1} parent=1 // pred_check
      _
    $region15: #{tpu_custom_call.1} parent=1 // pred_check_branch
      %38 = sbr.rel (0) target = $region17
    $region16: #{tpu_custom_call.1} parent=1 // pred_region
      %s40 = ssub.s32 2048, 2048
      %41 = vsyncadd [#allocation6], %s40
      %s42 = sshll.u32 [#allocation7], 4
      %s43 = int_to_ptr.vmem [resolvable:$true] %s42
      %48 = dma.hbm_to_vmem [thread:$0]  %s3, 2048, %s43, [#allocation6], 128, 128, 8
    $region17: #{tpu_custom_call.1} parent=1 // pred_fallthru
      _
    // Predicated region
    $region18: #{tpu_custom_call.1} parent=1 // pred_check
      _
    $region19: #{tpu_custom_call.1} parent=1 // pred_check_branch
      %50 = sbr.rel (0) target = $region21
    $region20: #{tpu_custom_call.1} parent=1 // pred_region
      _
    $region21: #{tpu_custom_call.1} parent=1 // pred_fallthru
      _
    // Predicated region
    $region22: #{tpu_custom_call.1} parent=1 // pred_check
      _
    $region23: #{tpu_custom_call.1} parent=1 // pred_check_branch
      %52 = sbr.rel (0) target = $region25
    $region24: #{tpu_custom_call.1} parent=1 // pred_region
      %53 = dma.done [#allocation3], 256
    $region25: #{tpu_custom_call.1} parent=1 // pred_fallthru
      _
    // Predicated region
    $region26: #{tpu_custom_call.1} parent=1 // pred_check
      _
    $region27: #{tpu_custom_call.1} parent=1 // pred_check_branch
      %55 = sbr.rel (0) target = $region29
    $region28: #{tpu_custom_call.1} parent=1 // pred_region
      %56 = dma.done [#allocation6], 2048
    $region29: #{tpu_custom_call.1} parent=1 // pred_fallthru
      _
    // Predicated region
    $region30: #{tpu_custom_call.1} parent=1 // pred_check
      _
    $region31: #{tpu_custom_call.1} parent=1 // pred_check_branch
      %58 = sbr.rel (0) target = $region33
    $region32: #{tpu_custom_call.1} parent=1 // pred_region
      %59 = dma.done [#allocation6], 2048
    $region33: #{tpu_custom_call.1} parent=1 // pred_fallthru
      _
    %v61 = vld [vmem:[#allocation2] sm:$0xff]
    %v62 = vld [vmem:[#allocation2 + $0x8] sm:$0xff]
    %v63 = vpack.c.bf16 %v61, %v61
    %v64 = vpack.c.bf16 %v62, %v62
    %v65 = vld [vmem:[#allocation5] sm:$0xf]
    %v66 = vld [vmem:[#allocation5 + $0x4] sm:$0xf]
    %v67 = vld [vmem:[#allocation5 + $0x8] sm:$0xf]
    %v68 = vld [vmem:[#allocation5 + $0xc] sm:$0xf]
    %v69 = vld [vmem:[#allocation5 + $0x10] sm:$0xf]
    %v70 = vld [vmem:[#allocation5 + $0x14] sm:$0xf]
    %v71 = vld [vmem:[#allocation5 + $0x18] sm:$0xf]
    %v72 = vld [vmem:[#allocation5 + $0x1c] sm:$0xf]
    %v73 = vld [vmem:[#allocation5 + $0x20] sm:$0xf]
    %v74 = vld [vmem:[#allocation5 + $0x24] sm:$0xf]
    %v75 = vld [vmem:[#allocation5 + $0x28] sm:$0xf]
    %v76 = vld [vmem:[#allocation5 + $0x2c] sm:$0xf]
    %v77 = vld [vmem:[#allocation5 + $0x30] sm:$0xf]
    %v78 = vld [vmem:[#allocation5 + $0x34] sm:$0xf]
    %v79 = vld [vmem:[#allocation5 + $0x38] sm:$0xf]
    %v80 = vld [vmem:[#allocation5 + $0x3c] sm:$0xf]
    %v81 = vld [vmem:[#allocation5 + $0x40] sm:$0xf]
    %v82 = vld [vmem:[#allocation5 + $0x44] sm:$0xf]
    %v83 = vld [vmem:[#allocation5 + $0x48] sm:$0xf]
    %v84 = vld [vmem:[#allocation5 + $0x4c] sm:$0xf]
    %v85 = vld [vmem:[#allocation5 + $0x50] sm:$0xf]
    %v86 = vld [vmem:[#allocation5 + $0x54] sm:$0xf]
    %v87 = vld [vmem:[#allocation5 + $0x58] sm:$0xf]
    %v88 = vld [vmem:[#allocation5 + $0x5c] sm:$0xf]
    %v89 = vld [vmem:[#allocation5 + $0x60] sm:$0xf]
    %v90 = vld [vmem:[#allocation5 + $0x64] sm:$0xf]
    %v91 = vld [vmem:[#allocation5 + $0x68] sm:$0xf]
    %v92 = vld [vmem:[#allocation5 + $0x6c] sm:$0xf]
    %v93 = vld [vmem:[#allocation5 + $0x70] sm:$0xf]
    %v94 = vld [vmem:[#allocation5 + $0x74] sm:$0xf]
    %v95 = vld [vmem:[#allocation5 + $0x78] sm:$0xf]
    %v96 = vld [vmem:[#allocation5 + $0x7c] sm:$0xf]
    %v97 = vld [vmem:[%s2] sm:$0x1]
    %v99 = vlaneseq
    %v100 = vshrl.u32 %v99, 7
    %v101 = vsub.s32 0, %v100
    %v102 = vrot.slane %v97, %v101
    %v136 = vunpack.c.l.b16 %v65
    %v137 = vunpack.c.l.b16 %v66
    %v138 = vunpack.c.l.b16 %v67
    %v139 = vunpack.c.l.b16 %v68
    %v140 = vunpack.c.l.b16 %v69
    %v141 = vunpack.c.l.b16 %v70
    %v142 = vunpack.c.l.b16 %v71
    %v143 = vunpack.c.l.b16 %v72
    %v144 = vunpack.c.l.b16 %v73
    %v145 = vunpack.c.l.b16 %v74
    %v146 = vunpack.c.l.b16 %v75
    %v147 = vunpack.c.l.b16 %v76
    %v148 = vunpack.c.l.b16 %v77
    %v149 = vunpack.c.l.b16 %v78
    %v150 = vunpack.c.l.b16 %v79
    %v151 = vunpack.c.l.b16 %v80
    %v152 = vunpack.c.l.b16 %v81
    %v153 = vunpack.c.l.b16 %v82
    %v154 = vunpack.c.l.b16 %v83
    %v155 = vunpack.c.l.b16 %v84
    %v156 = vunpack.c.l.b16 %v85
    %v157 = vunpack.c.l.b16 %v86
    %v158 = vunpack.c.l.b16 %v87
    %v159 = vunpack.c.l.b16 %v88
    %v160 = vunpack.c.l.b16 %v89
    %v161 = vunpack.c.l.b16 %v90
    %v162 = vunpack.c.l.b16 %v91
    %v163 = vunpack.c.l.b16 %v92
    %v164 = vunpack.c.l.b16 %v93
    %v165 = vunpack.c.l.b16 %v94
    %v166 = vunpack.c.l.b16 %v95
    %v167 = vunpack.c.l.b16 %v96
    %v168 = vpack.c.b16 %v137, %v136
    %v169 = vpack.c.b16 %v139, %v138
    %v170 = vpack.c.b16 %v141, %v140
    %v171 = vpack.c.b16 %v143, %v142
    %v172 = vpack.c.b16 %v145, %v144
    %v173 = vpack.c.b16 %v147, %v146
    %v174 = vpack.c.b16 %v149, %v148
    %v175 = vpack.c.b16 %v151, %v150
    %v176 = vpack.c.b16 %v153, %v152
    %v177 = vpack.c.b16 %v155, %v154
    %v178 = vpack.c.b16 %v157, %v156
    %v179 = vpack.c.b16 %v159, %v158
    %v180 = vpack.c.b16 %v161, %v160
    %v181 = vpack.c.b16 %v163, %v162
    %v182 = vpack.c.b16 %v165, %v164
    %v183 = vpack.c.b16 %v167, %v166
    %200 = vmatprep.subr.bf16.mxu0 0
    %201 = vmatpush1.bf16.msra.mxu0 %v168
    %202 = vmatprep.subr.bf16.mxu0 0
    %203 = vmatpush1.bf16.msra.mxu0 %v169
    %204 = vmatprep.subr.bf16.mxu0 0
    %205 = vmatpush1.bf16.msra.mxu0 %v170
    %206 = vmatprep.subr.bf16.mxu0 0
    %207 = vmatpush1.bf16.msra.mxu0 %v171
    %208 = vmatprep.subr.bf16.mxu0 0
    %209 = vmatpush1.bf16.msra.mxu0 %v172
    %210 = vmatprep.subr.bf16.mxu0 0
    %211 = vmatpush1.bf16.msra.mxu0 %v173
    %212 = vmatprep.subr.bf16.mxu0 0
    %213 = vmatpush1.bf16.msra.mxu0 %v174
    %214 = vmatprep.subr.bf16.mxu0 0
    %215 = vmatpush1.bf16.msra.mxu0 %v175
    %216 = vmatprep.subr.bf16.mxu0 0
    %217 = vmatpush1.bf16.msra.mxu0 %v176
    %218 = vmatprep.subr.bf16.mxu0 0
    %219 = vmatpush1.bf16.msra.mxu0 %v177
    %220 = vmatprep.subr.bf16.mxu0 0
    %221 = vmatpush1.bf16.msra.mxu0 %v178
    %222 = vmatprep.subr.bf16.mxu0 0
    %223 = vmatpush1.bf16.msra.mxu0 %v179
    %224 = vmatprep.subr.bf16.mxu0 0
    %225 = vmatpush1.bf16.msra.mxu0 %v180
    %226 = vmatprep.subr.bf16.mxu0 0
    %227 = vmatpush1.bf16.msra.mxu0 %v181
    %228 = vmatprep.subr.bf16.mxu0 0
    %229 = vmatpush1.bf16.msra.mxu0 %v182
    %230 = vmatprep.subr.bf16.mxu0 0
    %231 = vmatpush1.bf16.msra.mxu0 %v183
    %232 = vmatprep.mubr.bf16.mxu0 %v64
    %233 = vmatmul.mubr.bf16.gmra.mrb[0].mxu0 %v63
    %v234 = vpop.f32.mrb[0].mxu0
    %v235 = vadd.f32 %v102, %v234
    %v236 = vpop.f32.mrb[0].mxu0
    %v237 = vpop.f32.mrb[0].mxu0
    %v238 = vpop.f32.mrb[0].mxu0
    %239 = vdwg.mxu0
    %v240 = vmax.f32 %v235, 0.0
    %v241 = vpack.c.bf16 %v240, %v240
    %v242 = vld [vmem:[#allocation7] sm:$0xff]
    %v243 = vld [vmem:[#allocation7 + $0x8] sm:$0xff]
    %v244 = vld [vmem:[#allocation7 + $0x10] sm:$0xff]
    %v245 = vld [vmem:[#allocation7 + $0x18] sm:$0xff]
    %v246 = vld [vmem:[#allocation7 + $0x20] sm:$0xff]
    %v247 = vld [vmem:[#allocation7 + $0x28] sm:$0xff]
    %v248 = vld [vmem:[#allocation7 + $0x30] sm:$0xff]
    %v249 = vld [vmem:[#allocation7 + $0x38] sm:$0xff]
    %v250 = vld [vmem:[#allocation7 + $0x40] sm:$0xff]
    %v251 = vld [vmem:[#allocation7 + $0x48] sm:$0xff]
    %v252 = vld [vmem:[#allocation7 + $0x50] sm:$0xff]
    %v253 = vld [vmem:[#allocation7 + $0x58] sm:$0xff]
    %v254 = vld [vmem:[#allocation7 + $0x60] sm:$0xff]
    %v255 = vld [vmem:[#allocation7 + $0x68] sm:$0xff]
    %v256 = vld [vmem:[#allocation7 + $0x70] sm:$0xff]
    %v257 = vld [vmem:[#allocation7 + $0x78] sm:$0xff]
    %v258 = vld [vmem:[%s4] sm:$0x3]
    %v260 = vlaneseq
    %v261 = vshrl.u32 %v260, 7
    %v262 = vsub.s32 0, %v261
    %v263 = vrot.slane %v258, %v262
    %v264 = vlaneseq
    %v265 = vshrl.u32 %v264, 7
    %v266 = vsub.s32 1, %v265
    %v267 = vrot.slane %v258, %v266
    %v286 = vunpack.c.l.b16 %v242
    %v287 = vunpack.c.h.b16 %v242
    %v288 = vunpack.c.l.b16 %v243
    %v289 = vunpack.c.h.b16 %v243
    %v290 = vunpack.c.l.b16 %v244
    %v291 = vunpack.c.h.b16 %v244
    %v292 = vunpack.c.l.b16 %v245
    %v293 = vunpack.c.h.b16 %v245
    %v294 = vunpack.c.l.b16 %v246
    %v295 = vunpack.c.h.b16 %v246
    %v296 = vunpack.c.l.b16 %v247
    %v297 = vunpack.c.h.b16 %v247
    %v298 = vunpack.c.l.b16 %v248
    %v299 = vunpack.c.h.b16 %v248
    %v300 = vunpack.c.l.b16 %v249
    %v301 = vunpack.c.h.b16 %v249
    %v302 = vunpack.c.l.b16 %v250
    %v303 = vunpack.c.h.b16 %v250
    %v304 = vunpack.c.l.b16 %v251
    %v305 = vunpack.c.h.b16 %v251
    %v306 = vunpack.c.l.b16 %v252
    %v307 = vunpack.c.h.b16 %v252
    %v308 = vunpack.c.l.b16 %v253
    %v309 = vunpack.c.h.b16 %v253
    %v310 = vunpack.c.l.b16 %v254
    %v311 = vunpack.c.h.b16 %v254
    %v312 = vunpack.c.l.b16 %v255
    %v313 = vunpack.c.h.b16 %v255
    %v314 = vunpack.c.l.b16 %v256
    %v315 = vunpack.c.h.b16 %v256
    %v316 = vunpack.c.l.b16 %v257
    %v317 = vunpack.c.h.b16 %v257
    %v318 = vpack.c.b16 %v288, %v286
    %v319 = vpack.c.b16 %v289, %v287
    %v320 = vpack.c.b16 %v292, %v290
    %v321 = vpack.c.b16 %v293, %v291
    %v322 = vpack.c.b16 %v296, %v294
    %v323 = vpack.c.b16 %v297, %v295
    %v324 = vpack.c.b16 %v300, %v298
    %v325 = vpack.c.b16 %v301, %v299
    %v326 = vpack.c.b16 %v304, %v302
    %v327 = vpack.c.b16 %v305, %v303
    %v328 = vpack.c.b16 %v308, %v306
    %v329 = vpack.c.b16 %v309, %v307
    %v330 = vpack.c.b16 %v312, %v310
    %v331 = vpack.c.b16 %v313, %v311
    %v332 = vpack.c.b16 %v316, %v314
    %v333 = vpack.c.b16 %v317, %v315
    %350 = vmatprep.subr.bf16.mxu0 %v319
    %351 = vmatpush1.bf16.msra.mxu0 %v318
    %352 = vmatprep.subr.bf16.mxu0 %v321
    %353 = vmatpush1.bf16.msra.mxu0 %v320
    %354 = vmatprep.subr.bf16.mxu0 %v323
    %355 = vmatpush1.bf16.msra.mxu0 %v322
    %356 = vmatprep.subr.bf16.mxu0 %v325
    %357 = vmatpush1.bf16.msra.mxu0 %v324
    %358 = vmatprep.subr.bf16.mxu0 %v327
    %359 = vmatpush1.bf16.msra.mxu0 %v326
    %360 = vmatprep.subr.bf16.mxu0 %v329
    %361 = vmatpush1.bf16.msra.mxu0 %v328
    %362 = vmatprep.subr.bf16.mxu0 %v331
    %363 = vmatpush1.bf16.msra.mxu0 %v330
    %364 = vmatprep.subr.bf16.mxu0 %v333
    %365 = vmatpush1.bf16.msra.mxu0 %v332
    %366 = vmatprep.subr.bf16.mxu0 0
    %367 = vmatpush1.bf16.msra.mxu0 0
    %368 = vmatprep.subr.bf16.mxu0 0
    %369 = vmatpush1.bf16.msra.mxu0 0
    %370 = vmatprep.subr.bf16.mxu0 0
    %371 = vmatpush1.bf16.msra.mxu0 0
    %372 = vmatprep.subr.bf16.mxu0 0
    %373 = vmatpush1.bf16.msra.mxu0 0
    %374 = vmatprep.subr.bf16.mxu0 0
    %375 = vmatpush1.bf16.msra.mxu0 0
    %376 = vmatprep.subr.bf16.mxu0 0
    %377 = vmatpush1.bf16.msra.mxu0 0
    %378 = vmatprep.subr.bf16.mxu0 0
    %379 = vmatpush1.bf16.msra.mxu0 0
    %380 = vmatprep.subr.bf16.mxu0 0
    %381 = vmatpush1.bf16.msra.mxu0 0
    %382 = vmatprep.mubr.bf16.mxu0 0
    %383 = vmatmul.mubr.bf16.gmra.mrb[0].mxu0 %v241
    %v384 = vpop.f32.mrb[0].mxu0
    %v385 = vadd.f32 %v263, %v384
    %v386 = vpop.f32.mrb[0].mxu0
    %v387 = vadd.f32 %v267, %v386
    %v388 = vpop.f32.mrb[0].mxu0
    %v389 = vpop.f32.mrb[0].mxu0
    %390 = vdwg.mxu0
    %391 = vst [vmem:[#allocation8] sm:$0xff] %v385
    %392 = vst [vmem:[#allocation8 + $0x8] sm:$0xff] %v387
    // Predicated region
    $region34: #{tpu_custom_call.1} parent=1 // pred_check
      _
    $region35: #{tpu_custom_call.1} parent=1 // pred_check_branch
      %394 = sbr.rel (0) target = $region37
    $region36: #{tpu_custom_call.1} parent=1 // pred_region
      %s396 = ssub.s32 256, 256
      %397 = vsyncadd [#allocation4], %s396
      %s399 = sshll.u32 [#allocation8], 4
      %s400 = int_to_ptr.vmem [resolvable:$true] %s399
      %402 = dma.vmem_to_hbm [thread:$0]  %s400, 256, %s5, [#allocation4]
    $region37: #{tpu_custom_call.1} parent=1 // pred_fallthru
      _
    // Predicated region
    $region38: #{tpu_custom_call.1} parent=1 // pred_check
      _
    $region39: #{tpu_custom_call.1} parent=1 // pred_check_branch
      %404 = sbr.rel (0) target = $region41
    $region40: #{tpu_custom_call.1} parent=1 // pred_region
      %405 = dma.done [#allocation4], 256
    $region41: #{tpu_custom_call.1} parent=1 // pred_fallthru
      _
    %406 = vsyncpa [#allocation3], 1
    %407 = vsyncpa [#allocation6], 1
    %408 = vsyncpa [#allocation4], 1

</llo_original>
